<compile_context>
chip_gen: v7x
topology: tpu7x:2x2x1
jax: 0.10.0
libtpu: 0.0.40
codegen_flags: <defaults>
</compile_context>

<pallas_src>
import jax
import jax.numpy as jnp
from jax.experimental import pallas as pl
from jax.experimental.pallas import tpu as pltpu


def _round_up(x, m):
    return ((x + m - 1) // m) * m


# ----------------------------- Pallas kernel ------------------------------ #
def _decoder_kernel(
    z_ref,    # [TB, latent_dim]               (native dtype; cast in-kernel)
    c_ref,    # [TB, conditional_dim]          (native dtype; cast in-kernel)
    w1z_ref,  # [latent_dim, H1]               (compute dtype, pre-split)
    w1c_ref,  # [conditional_dim, H1]          (compute dtype, pre-split)
    w2_ref,   # [H1, H2]                       (compute dtype)
    w3_ref,   # [H2, H3]                       (compute dtype)
    wo_ref,   # [H3, input_dim+cond_dim]       (compute dtype, fused heads)
    b_ref,    # [1, H1+H2+H3+input_dim+cond_dim]  (f32, packed biases)
    out_ref,  # [TB, input_dim+cond_dim]
):
    h1 = w1z_ref.shape[1]
    h2 = w2_ref.shape[1]
    h3 = w3_ref.shape[1]

    biases = b_ref[...]                                   # one DMA, static slices
    b1 = biases[:, :h1]
    b2 = biases[:, h1:h1 + h2]
    b3 = biases[:, h1 + h2:h1 + h2 + h3]
    bo = biases[:, h1 + h2 + h3:]

    wdt = w1z_ref.dtype
    # Layer 1: split-K matmul on (z | condition) — avoids materializing the
    # concatenated z_cond tensor; input casts happen here on the VPU.
    h = (
        jnp.dot(z_ref[...].astype(wdt), w1z_ref[...],
                preferred_element_type=jnp.float32)
        + jnp.dot(c_ref[...].astype(wdt), w1c_ref[...],
                  preferred_element_type=jnp.float32)
        + b1
    )
    h = jnp.maximum(h, 0.0)

    # Layers 2 and 3 (+ ReLU); f32 accumulation throughout.
    h = jnp.dot(h.astype(w2_ref.dtype), w2_ref[...],
                preferred_element_type=jnp.float32) + b2
    h = jnp.maximum(h, 0.0)
    h = jnp.dot(h.astype(w3_ref.dtype), w3_ref[...],
                preferred_element_type=jnp.float32) + b3
    h = jnp.maximum(h, 0.0)

    # Dropout(0.5): identity in eval mode.
    # TODO(synk): training-mode dropout would need pltpu.prng_seed +
    # pltpu.prng_random_bits masking; omitted to match inference semantics.

    # Fused task heads: one matmul producing [out1 | out2], one lane-dense store.
    o = jnp.dot(h.astype(wo_ref.dtype), wo_ref[...],
                preferred_element_type=jnp.float32) + bo
    out_ref[...] = o.astype(out_ref.dtype)


# ------------------------ one-time parameter packing ----------------------- #
def prepare_params(params, *, compute_dtype=jnp.float32):
    """Hoists all per-call packing out of the forward path (do this once)."""
    (w1, b1, w2, b2, w3, b3, wo1, bo1, wo2, bo2) = params
    input_dim = wo1.shape[1]
    conditional_dim = wo2.shape[1]
    latent_dim = w1.shape[0] - conditional_dim
    cd = compute_dtype
    return {
        "w1z": w1[:latent_dim].astype(cd),       # pre-split: tile-aligned operands
        "w1c": w1[latent_dim:].astype(cd),
        "w2": w2.astype(cd),
        "w3": w3.astype(cd),
        "wo": jnp.concatenate([wo1, wo2], axis=1).astype(cd),         # fused heads
        "b_all": jnp.concatenate([b1, b2, b3, bo1, bo2], axis=1).astype(jnp.float32),
        "latent_dim": latent_dim,
        "input_dim": input_dim,
        "conditional_dim": conditional_dim,
    }


# ------------------------------ forward wrapper ----------------------------- #
def multitask_decoder_forward(z, condition, prepared, *,
                              block_batch=4096, single_call_max=1024,
                              min_blocks=2, out_dtype=None):
    """z: [B, latent_dim], condition: [B, conditional_dim] -> (out1, out2)."""
    w1z, w1c, w2, w3 = prepared["w1z"], prepared["w1c"], prepared["w2"], prepared["w3"]
    wo, b_all = prepared["wo"], prepared["b_all"]
    latent_dim = prepared["latent_dim"]
    input_dim = prepared["input_dim"]
    conditional_dim = prepared["conditional_dim"]
    d_out = input_dim + conditional_dim
    B = z.shape[0]
    if out_dtype is None:
        out_dtype = z.dtype
    h1, h2, h3 = w1z.shape[1], w2.shape[1], w3.shape[1]

    # ---- advisory cost estimate ------------------------------------------ #
    d0 = latent_dim + conditional_dim
    flops = 2 * B * (d0 * h1 + h1 * h2 + h2 * h3 + h3 * d_out)
    weight_bytes = sum(int(a.size) * a.dtype.itemsize
                       for a in (w1z, w1c, w2, w3, wo, b_all))
    in_bytes = int(z.size) * z.dtype.itemsize + int(condition.size) * condition.dtype.itemsize
    out_bytes = int(B) * d_out * jnp.dtype(out_dtype).itemsize
    cost = pl.CostEstimate(flops=flops, transcendentals=0,
                           bytes_accessed=weight_bytes + in_bytes + out_bytes)

    operands = (z, condition, w1z, w1c, w2, w3, wo, b_all)

    if B <= single_call_max:
        # Small batch: everything resident in VMEM, single invocation.
        vmem = pl.BlockSpec(memory_space=pltpu.MemorySpace.VMEM)
        out = pl.pallas_call(
            _decoder_kernel,
            out_shape=jax.ShapeDtypeStruct((B, d_out), out_dtype),
            in_specs=[vmem] * 8,
            out_specs=vmem,
            cost_estimate=cost,
        )(*operands)
        return out[:, :input_dim], out[:, input_dim:]

    # Large batch: tile over batch with BIG blocks (per-step overhead dominates
    # compute at these dims), but keep >= min_blocks grid steps so v7x's two
    # TensorCores both get work. No padding / no output slice: Pallas masks
    # the partial last block.
    tb = min(block_batch, _round_up(pl.cdiv(B, min_blocks), 8))
    n_blk = pl.cdiv(B, tb)

    def pinned(a):
        # Tiny weights/biases: same block every step -> resident, not re-fetched.
        return pl.BlockSpec(a.shape, lambda i: (0, 0))

    out = pl.pallas_call(
        _decoder_kernel,
        out_shape=jax.ShapeDtypeStruct((B, d_out), out_dtype),
        grid=(n_blk,),
        in_specs=[
            pl.BlockSpec((tb, latent_dim), lambda i: (i, 0)),
            pl.BlockSpec((tb, conditional_dim), lambda i: (i, 0)),
            pinned(w1z), pinned(w1c), pinned(w2), pinned(w3), pinned(wo), pinned(b_all),
        ],
        out_specs=pl.BlockSpec((tb, d_out), lambda i: (i, 0)),
        compiler_params=pltpu.CompilerParams(dimension_semantics=("parallel",)),
        cost_estimate=cost,
    )(*operands)
    return out[:, :input_dim], out[:, input_dim:]


# ------------------------------ parameters --------------------------------- #
def init_params(key, latent_dim, input_dim, conditional_dim, hidden_dims):
    """Synthetic Linear params: weight [in, out] (pre-transposed), bias [1, out]."""
    dims_in = [latent_dim + conditional_dim] + list(hidden_dims[:-1])
    dims_out = list(hidden_dims)
    params = []
    keys = jax.random.split(key, len(hidden_dims) + 2)
    for k, din, dout in zip(keys[: len(hidden_dims)], dims_in, dims_out):
        kw, kb = jax.random.split(k)
        scale = 1.0 / jnp.sqrt(din)
        params.append(jax.random.uniform(kw, (din, dout), jnp.float32, -scale, scale))
        params.append(jax.random.uniform(kb, (1, dout), jnp.float32, -scale, scale))
    h_last = hidden_dims[-1]
    for k, dout in zip(keys[len(hidden_dims):], (input_dim, conditional_dim)):
        kw, kb = jax.random.split(k)
        scale = 1.0 / jnp.sqrt(h_last)
        params.append(jax.random.uniform(kw, (h_last, dout), jnp.float32, -scale, scale))
        params.append(jax.random.uniform(kb, (1, dout), jnp.float32, -scale, scale))
    return tuple(params)


# ------------------------------ reference ---------------------------------- #
def _reference_forward(z, condition, params, compute_dtype=jnp.float32):
    """Pure-JAX reference applying the same dtype policy as the kernel."""
    (w1, b1, w2, b2, w3, b3, wo1, bo1, wo2, bo2) = params
    cd = compute_dtype
    latent_dim = z.shape[1]

    def mm(a, w):
        return jnp.dot(a.astype(cd), w.astype(cd),
                       preferred_element_type=jnp.float32)

    h = jnp.maximum(mm(z, w1[:latent_dim]) + mm(condition, w1[latent_dim:]) + b1, 0.0)
    h = jnp.maximum(mm(h, w2) + b2, 0.0)
    h = jnp.maximum(mm(h, w3) + b3, 0.0)
    return mm(h, wo1) + bo1, mm(h, wo2) + bo2


# --------------------------------- main ------------------------------------ #
if __name__ == "__main__":
    latent_dim, input_dim, conditional_dim = 8, 16, 4
    hidden_dims = [32, 32, 32]

    key = jax.random.PRNGKey(0)
    kz, kc, kp = jax.random.split(key, 3)
    params = init_params(kp, latent_dim, input_dim, conditional_dim, hidden_dims)

    # one-time parameter packing (hoisted out of the forward path)
    prep_f32 = prepare_params(params, compute_dtype=jnp.float32)
    prep_bf16 = prepare_params(params, compute_dtype=jnp.bfloat16)

    # -- small batch, f32 everywhere (tight numerical check) ---------------- #
    B = 2
    z = jax.random.normal(kz, (B, latent_dim), jnp.float32)
    cond = jax.random.normal(kc, (B, conditional_dim), jnp.float32)

    o1, o2 = multitask_decoder_forward(z, cond, prep_f32)
    jax.block_until_ready((o1, o2))
    r1, r2 = _reference_forward(z, cond, params, jnp.float32)
    assert o1.shape == (B, input_dim) and o2.shape == (B, conditional_dim)
    assert jnp.allclose(o1, r1, atol=1e-5, rtol=1e-5)
    assert jnp.allclose(o2, r2, atol=1e-5, rtol=1e-5)

    # -- small batch, bf16 MXU path (f32 accumulation) ---------------------- #
    o1b, o2b = multitask_decoder_forward(z, cond, prep_bf16)
    jax.block_until_ready((o1b, o2b))
    r1b, r2b = _reference_forward(z, cond, params, jnp.bfloat16)
    assert jnp.allclose(o1b, r1b, atol=1e-2, rtol=1e-2)
    assert jnp.allclose(o2b, r2b, atol=1e-2, rtol=1e-2)

    # -- large batch: batch-tiled grid, partial masked last block (no pad) --- #
    BL = 3000  # -> tb=1504, 2 blocks (v7x: both TCs), last block 1496 rows masked
    zl = jax.random.normal(jax.random.fold_in(kz, 1), (BL, latent_dim), jnp.float32)
    cl = jax.random.normal(jax.random.fold_in(kc, 1), (BL, conditional_dim), jnp.float32)
    o1l, o2l = multitask_decoder_forward(zl, cl, prep_f32,
                                         block_batch=4096, single_call_max=1024)
    jax.block_until_ready((o1l, o2l))
    r1l, r2l = _reference_forward(zl, cl, params, jnp.float32)
    assert o1l.shape == (BL, input_dim) and o2l.shape == (BL, conditional_dim)
    assert jnp.allclose(o1l, r1l, atol=1e-5, rtol=1e-5)
    assert jnp.allclose(o2l, r2l, atol=1e-5, rtol=1e-5)

    # -- bf16 output knob for the bandwidth-bound large-batch regime -------- #
    o1s, o2s = multitask_decoder_forward(zl, cl, prep_f32,
                                         block_batch=4096, single_call_max=1024,
                                         out_dtype=jnp.bfloat16)
    jax.block_until_ready((o1s, o2s))
    assert o1s.dtype == jnp.bfloat16 and o2s.dtype == jnp.bfloat16
    assert jnp.allclose(o1s.astype(jnp.float32), r1l, atol=3e-2, rtol=3e-2)
    assert jnp.allclose(o2s.astype(jnp.float32), r2l, atol=3e-2, rtol=3e-2)

    print("KERNEL_OK")
</pallas_src>

<mosaic_0001>
module attributes {stable_mosaic.version = 11 : i64} {
  func.func @_decoder_kernel(%arg0: memref<2x8xf32, #tpu.memory_space<vmem>>, %arg1: memref<2x4xf32, #tpu.memory_space<vmem>>, %arg2: memref<8x32xf32, #tpu.memory_space<vmem>>, %arg3: memref<4x32xf32, #tpu.memory_space<vmem>>, %arg4: memref<32x32xf32, #tpu.memory_space<vmem>>, %arg5: memref<32x32xf32, #tpu.memory_space<vmem>>, %arg6: memref<32x20xf32, #tpu.memory_space<vmem>>, %arg7: memref<1x116xf32, #tpu.memory_space<vmem>>, %arg8: memref<2x20xf32, #tpu.memory_space<vmem>>) attributes {dimension_semantics = [], scalar_prefetch = 0 : i64, scratch_operands = 0 : i64, tpu.core_type = #tpu.core_type<tc>} {
    %c0 = arith.constant 0 : index
    %c0_0 = arith.constant 0 : index
    %0 = vector.load %arg7[%c0, %c0_0] : memref<1x116xf32, #tpu.memory_space<vmem>>, vector<1x116xf32>
    %1 = vector.extract_strided_slice %0 {offsets = [0, 0], sizes = [1, 32], strides = [1, 1]} : vector<1x116xf32> to vector<1x32xf32>
    %2 = vector.extract_strided_slice %0 {offsets = [0, 32], sizes = [1, 32], strides = [1, 1]} : vector<1x116xf32> to vector<1x32xf32>
    %3 = vector.extract_strided_slice %0 {offsets = [0, 64], sizes = [1, 32], strides = [1, 1]} : vector<1x116xf32> to vector<1x32xf32>
    %4 = vector.extract_strided_slice %0 {offsets = [0, 96], sizes = [1, 20], strides = [1, 1]} : vector<1x116xf32> to vector<1x20xf32>
    %c0_1 = arith.constant 0 : index
    %c0_2 = arith.constant 0 : index
    %5 = vector.load %arg0[%c0_1, %c0_2] : memref<2x8xf32, #tpu.memory_space<vmem>>, vector<2x8xf32>
    %c0_3 = arith.constant 0 : index
    %c0_4 = arith.constant 0 : index
    %6 = vector.load %arg2[%c0_3, %c0_4] : memref<8x32xf32, #tpu.memory_space<vmem>>, vector<8x32xf32>
    %cst = arith.constant dense<0.000000e+00> : vector<2x32xf32>
    %7 = tpu.matmul %5, %6, %cst {dimension_numbers = #tpu.dot_dimension_numbers<[1], [0], [0], [1], [0, 0, 1, 1], [], []>} : vector<2x8xf32>, vector<8x32xf32>, vector<2x32xf32> -> vector<2x32xf32>
    %c0_5 = arith.constant 0 : index
    %c0_6 = arith.constant 0 : index
    %8 = vector.load %arg1[%c0_5, %c0_6] : memref<2x4xf32, #tpu.memory_space<vmem>>, vector<2x4xf32>
    %c0_7 = arith.constant 0 : index
    %c0_8 = arith.constant 0 : index
    %9 = vector.load %arg3[%c0_7, %c0_8] : memref<4x32xf32, #tpu.memory_space<vmem>>, vector<4x32xf32>
    %cst_9 = arith.constant dense<0.000000e+00> : vector<2x32xf32>
    %10 = tpu.matmul %8, %9, %cst_9 {dimension_numbers = #tpu.dot_dimension_numbers<[1], [0], [0], [1], [0, 0, 1, 1], [], []>} : vector<2x4xf32>, vector<4x32xf32>, vector<2x32xf32> -> vector<2x32xf32>
    %11 = arith.addf %7, %10 : vector<2x32xf32>
    %12 = vector.broadcast %1 : vector<1x32xf32> to vector<2x32xf32>
    %13 = arith.addf %11, %12 : vector<2x32xf32>
    %cst_10 = arith.constant 0.000000e+00 : f32
    %14 = vector.broadcast %cst_10 : f32 to vector<2x32xf32>
    %15 = arith.maximumf %13, %14 : vector<2x32xf32>
    %c0_11 = arith.constant 0 : index
    %c0_12 = arith.constant 0 : index
    %16 = vector.load %arg4[%c0_11, %c0_12] : memref<32x32xf32, #tpu.memory_space<vmem>>, vector<32x32xf32>
    %cst_13 = arith.constant dense<0.000000e+00> : vector<2x32xf32>
    %17 = tpu.matmul %15, %16, %cst_13 {dimension_numbers = #tpu.dot_dimension_numbers<[1], [0], [0], [1], [0, 0, 1, 1], [], []>} : vector<2x32xf32>, vector<32x32xf32>, vector<2x32xf32> -> vector<2x32xf32>
    %18 = vector.broadcast %2 : vector<1x32xf32> to vector<2x32xf32>
    %19 = arith.addf %17, %18 : vector<2x32xf32>
    %cst_14 = arith.constant 0.000000e+00 : f32
    %20 = vector.broadcast %cst_14 : f32 to vector<2x32xf32>
    %21 = arith.maximumf %19, %20 : vector<2x32xf32>
    %c0_15 = arith.constant 0 : index
    %c0_16 = arith.constant 0 : index
    %22 = vector.load %arg5[%c0_15, %c0_16] : memref<32x32xf32, #tpu.memory_space<vmem>>, vector<32x32xf32>
    %cst_17 = arith.constant dense<0.000000e+00> : vector<2x32xf32>
    %23 = tpu.matmul %21, %22, %cst_17 {dimension_numbers = #tpu.dot_dimension_numbers<[1], [0], [0], [1], [0, 0, 1, 1], [], []>} : vector<2x32xf32>, vector<32x32xf32>, vector<2x32xf32> -> vector<2x32xf32>
    %24 = vector.broadcast %3 : vector<1x32xf32> to vector<2x32xf32>
    %25 = arith.addf %23, %24 : vector<2x32xf32>
    %cst_18 = arith.constant 0.000000e+00 : f32
    %26 = vector.broadcast %cst_18 : f32 to vector<2x32xf32>
    %27 = arith.maximumf %25, %26 : vector<2x32xf32>
    %c0_19 = arith.constant 0 : index
    %c0_20 = arith.constant 0 : index
    %28 = vector.load %arg6[%c0_19, %c0_20] : memref<32x20xf32, #tpu.memory_space<vmem>>, vector<32x20xf32>
    %cst_21 = arith.constant dense<0.000000e+00> : vector<2x20xf32>
    %29 = tpu.matmul %27, %28, %cst_21 {dimension_numbers = #tpu.dot_dimension_numbers<[1], [0], [0], [1], [0, 0, 1, 1], [], []>} : vector<2x32xf32>, vector<32x20xf32>, vector<2x20xf32> -> vector<2x20xf32>
    %30 = vector.broadcast %4 : vector<1x20xf32> to vector<2x20xf32>
    %31 = arith.addf %29, %30 : vector<2x20xf32>
    %c0_22 = arith.constant 0 : index
    %c0_23 = arith.constant 0 : index
    %32 = vector.load %arg8[%c0_22, %c0_23] : memref<2x20xf32, #tpu.memory_space<vmem>>, vector<2x20xf32>
    tpu.vector_store %arg8[%c0_22, %c0_23], %31 {strides = array<i32>} : memref<2x20xf32, #tpu.memory_space<vmem>>, vector<2x20xf32>,
    return
  }
}

</mosaic_0001>

<llo_original>
// kernel: tpu_custom_call.1
$region0: #{tpu_custom_call.1}
  #allocation0 [shape = 'u32[]', space=smem, size = 0x4, offset = 0x4, fixed_abs, tag = 'smem constant byte address 0x4 - core index']
  #allocation1 [shape = 'u32[144,128]{1,0:T(1,128)}', space=vmem, size = 0x12000, scoped, tag = 'internal scratch']
  %s0 = inlined_call_operand.vmem [shape: f32[2,8], index: 0, kind: input, shape index: {}]
  %s1 = inlined_call_operand.hbm [shape: f32[2,4], index: 1, kind: input, shape index: {}]
  %s2 = inlined_call_operand.hbm [shape: f32[8,32], index: 2, kind: input, shape index: {}]
  %s3 = inlined_call_operand.hbm [shape: f32[4,32], index: 3, kind: input, shape index: {}]
  %s4 = inlined_call_operand.vmem [shape: f32[32,32], index: 4, kind: input, shape index: {}]
  %s5 = inlined_call_operand.vmem [shape: f32[32,32], index: 5, kind: input, shape index: {}]
  %s6 = inlined_call_operand.vmem [shape: f32[32,20], index: 6, kind: input, shape index: {}]
  %s7 = inlined_call_operand.vmem [shape: f32[1,116], index: 7, kind: input, shape index: {}]
  %s8 = inlined_call_operand.hbm [shape: f32[2,20], index: 8, kind: output, shape index: {}]
  %s9 = sld [smem:[#allocation0]]
  $region54: #{tpu_custom_call.1} parent=0
    _
  %s11 = ssub.s32 1, %s9
  %s12 = scalar_select 0, %s11, %s9
  $region1: #{tpu_custom_call.1} parent=0
    #allocation2 [shape = 'u8[1024]{0}', space=vmem, size = 0x400, scoped, tag = 'input window, operand 1, single buffered']
    #allocation3 [shape = 's32[1]{0}', space=sflag, size = 0x4, scoped, tag = 'scoped memory for tpu_custom_call.1']
    #allocation4 [shape = 's32[1]{0}', space=sflag, size = 0x4, scoped, tag = 'scoped memory for tpu_custom_call.1']
    #allocation5 [shape = 'u8[4096]{0}', space=vmem, size = 0x1000, scoped, tag = 'input window, operand 2, single buffered']
    #allocation6 [shape = 's32[1]{0}', space=sflag, size = 0x4, scoped, tag = 'scoped memory for tpu_custom_call.1']
    #allocation7 [shape = 'u8[2048]{0}', space=vmem, size = 0x800, scoped, tag = 'input window, operand 3, single buffered']
    #allocation8 [shape = 'u8[1024]{0}', space=vmem, size = 0x400, scoped, tag = 'output window, operand 0, single buffered']
    %13 = vsyncpa [#allocation3], 0
    %14 = vsyncpa [#allocation6], 0
    %15 = vsyncpa [#allocation4], 0
    // Predicated region
    $region2: #{tpu_custom_call.1} parent=1 // pred_check
      _
    $region3: #{tpu_custom_call.1} parent=1 // pred_check_branch
      %17 = sbr.rel (0) target = $region5
    $region4: #{tpu_custom_call.1} parent=1 // pred_region
      _
    $region5: #{tpu_custom_call.1} parent=1 // pred_fallthru
      _
    // Predicated region
    $region6: #{tpu_custom_call.1} parent=1 // pred_check
      _
    $region7: #{tpu_custom_call.1} parent=1 // pred_check_branch
      %19 = sbr.rel (0) target = $region9
    $region8: #{tpu_custom_call.1} parent=1 // pred_region
      %s21 = ssub.s32 32, 32
      %22 = vsyncadd [#allocation3], %s21
      %s24 = sshll.u32 [#allocation2], 4
      %s25 = int_to_ptr.vmem [resolvable:$true] %s24
      %27 = dma.hbm_to_vmem [thread:$0]  %s1, 32, %s25, [#allocation3]
    $region9: #{tpu_custom_call.1} parent=1 // pred_fallthru
      _
    // Predicated region
    $region10: #{tpu_custom_call.1} parent=1 // pred_check
      _
    $region11: #{tpu_custom_call.1} parent=1 // pred_check_branch
      %29 = sbr.rel (0) target = $region13
    $region12: #{tpu_custom_call.1} parent=1 // pred_region
      %s31 = ssub.s32 128, 128
      %32 = vsyncadd [#allocation6], %s31
      %s34 = sshll.u32 [#allocation5], 4
      %s35 = int_to_ptr.vmem [resolvable:$true] %s34
      %37 = dma.hbm_to_vmem [thread:$0]  %s2, 128, %s35, [#allocation6]
    $region13: #{tpu_custom_call.1} parent=1 // pred_fallthru
      _
    // Predicated region
    $region14: #{tpu_custom_call.1} parent=1 // pred_check
      _
    $region15: #{tpu_custom_call.1} parent=1 // pred_check_branch
      %39 = sbr.rel (0) target = $region17
    $region16: #{tpu_custom_call.1} parent=1 // pred_region
      %s41 = ssub.s32 64, 64
      %42 = vsyncadd [#allocation6], %s41
      %s44 = sshll.u32 [#allocation7], 4
      %s45 = int_to_ptr.vmem [resolvable:$true] %s44
      %47 = dma.hbm_to_vmem [thread:$0]  %s3, 64, %s45, [#allocation6]
    $region17: #{tpu_custom_call.1} parent=1 // pred_fallthru
      _
    // Predicated region
    $region18: #{tpu_custom_call.1} parent=1 // pred_check
      _
    $region19: #{tpu_custom_call.1} parent=1 // pred_check_branch
      %49 = sbr.rel (0) target = $region21
    $region20: #{tpu_custom_call.1} parent=1 // pred_region
      _
    $region21: #{tpu_custom_call.1} parent=1 // pred_fallthru
      _
    // Predicated region
    $region22: #{tpu_custom_call.1} parent=1 // pred_check
      _
    $region23: #{tpu_custom_call.1} parent=1 // pred_check_branch
      %51 = sbr.rel (0) target = $region25
    $region24: #{tpu_custom_call.1} parent=1 // pred_region
      _
    $region25: #{tpu_custom_call.1} parent=1 // pred_fallthru
      _
    // Predicated region
    $region26: #{tpu_custom_call.1} parent=1 // pred_check
      _
    $region27: #{tpu_custom_call.1} parent=1 // pred_check_branch
      %53 = sbr.rel (0) target = $region29
    $region28: #{tpu_custom_call.1} parent=1 // pred_region
      _
    $region29: #{tpu_custom_call.1} parent=1 // pred_fallthru
      _
    // Predicated region
    $region30: #{tpu_custom_call.1} parent=1 // pred_check
      _
    $region31: #{tpu_custom_call.1} parent=1 // pred_check_branch
      %55 = sbr.rel (0) target = $region33
    $region32: #{tpu_custom_call.1} parent=1 // pred_region
      _
    $region33: #{tpu_custom_call.1} parent=1 // pred_fallthru
      _
    // Predicated region
    $region34: #{tpu_custom_call.1} parent=1 // pred_check
      _
    $region35: #{tpu_custom_call.1} parent=1 // pred_check_branch
      %57 = sbr.rel (0) target = $region37
    $region36: #{tpu_custom_call.1} parent=1 // pred_region
      %58 = dma.done [#allocation3], 32
    $region37: #{tpu_custom_call.1} parent=1 // pred_fallthru
      _
    // Predicated region
    $region38: #{tpu_custom_call.1} parent=1 // pred_check
      _
    $region39: #{tpu_custom_call.1} parent=1 // pred_check_branch
      %60 = sbr.rel (0) target = $region41
    $region40: #{tpu_custom_call.1} parent=1 // pred_region
      %61 = dma.done [#allocation6], 128
    $region41: #{tpu_custom_call.1} parent=1 // pred_fallthru
      _
    // Predicated region
    $region42: #{tpu_custom_call.1} parent=1 // pred_check
      _
    $region43: #{tpu_custom_call.1} parent=1 // pred_check_branch
      %63 = sbr.rel (0) target = $region45
    $region44: #{tpu_custom_call.1} parent=1 // pred_region
      %64 = dma.done [#allocation6], 64
    $region45: #{tpu_custom_call.1} parent=1 // pred_fallthru
      _
    %v65 = vld [vmem:[%s7] sm:$0x1]
    %v66 = vld [vmem:[%s0] sm:$0x3]
    %v67 = vld [vmem:[#allocation5] sm:$0xff]
    %v68 = vld [vmem:[#allocation2] sm:$0x3]
    %v69 = vld [vmem:[#allocation7] sm:$0xf]
    %vm70 = vcmask 31744
    %v72 = vsel %vm70, %v68, 0
    %vm74 = vcmask 1043456
    %v76 = vsel %vm74, %v69, 0
    %78 = vmatprep.subr.mxu0 0.0
    %79 = vmatpush1.msra.mxu0 %v76
    %80 = vmatprep.subr.mxu0 0.0
    %81 = vmatpush1.msra.mxu0 0.0
    %82 = vmatprep.subr.mxu0 0.0
    %83 = vmatpush1.msra.mxu0 0.0
    %84 = vmatprep.subr.mxu0 0.0
    %85 = vmatpush1.msra.mxu0 0.0
    %86 = vmatprep.subr.mxu0 0.0
    %87 = vmatpush1.msra.mxu0 0.0
    %88 = vmatprep.subr.mxu0 0.0
    %89 = vmatpush1.msra.mxu0 0.0
    %90 = vmatprep.subr.mxu0 0.0
    %91 = vmatpush1.msra.mxu0 0.0
    %92 = vmatprep.subr.mxu0 0.0
    %93 = vmatpush1.msra.mxu0 0.0
    %94 = vmatprep.subr.mxu0 0.0
    %95 = vmatpush1.msra.mxu0 0.0
    %96 = vmatprep.subr.mxu0 0.0
    %97 = vmatpush1.msra.mxu0 0.0
    %98 = vmatprep.subr.mxu0 0.0
    %99 = vmatpush1.msra.mxu0 0.0
    %100 = vmatprep.subr.mxu0 0.0
    %101 = vmatpush1.msra.mxu0 0.0
    %102 = vmatprep.subr.mxu0 0.0
    %103 = vmatpush1.msra.mxu0 0.0
    %104 = vmatprep.subr.mxu0 0.0
    %105 = vmatpush1.msra.mxu0 0.0
    %106 = vmatprep.subr.mxu0 0.0
    %107 = vmatpush1.msra.mxu0 0.0
    %108 = vmatprep.subr.mxu0 0.0
    %109 = vmatpush1.msra.mxu0 0.0
    %110 = vmatprep.subr.mxu0 0.0
    %111 = vmatpush1.msra.mxu0 0.0
    %112 = vmatprep.subr.mxu0 0.0
    %113 = vmatpush1.msra.mxu0 0.0
    %114 = vmatprep.subr.mxu0 0.0
    %115 = vmatpush1.msra.mxu0 0.0
    %116 = vmatprep.subr.mxu0 0.0
    %117 = vmatpush1.msra.mxu0 0.0
    %118 = vmatprep.subr.mxu0 0.0
    %119 = vmatpush1.msra.mxu0 0.0
    %120 = vmatprep.subr.mxu0 0.0
    %121 = vmatpush1.msra.mxu0 0.0
    %122 = vmatprep.subr.mxu0 0.0
    %123 = vmatpush1.msra.mxu0 0.0
    %124 = vmatprep.subr.mxu0 0.0
    %125 = vmatpush1.msra.mxu0 0.0
    %126 = vmatprep.subr.mxu0 0.0
    %127 = vmatpush1.msra.mxu0 0.0
    %128 = vmatprep.subr.mxu0 0.0
    %129 = vmatpush1.msra.mxu0 0.0
    %130 = vmatprep.subr.mxu0 0.0
    %131 = vmatpush1.msra.mxu0 0.0
    %132 = vmatprep.subr.mxu0 0.0
    %133 = vmatpush1.msra.mxu0 0.0
    %134 = vmatprep.subr.mxu0 0.0
    %135 = vmatpush1.msra.mxu0 0.0
    %136 = vmatprep.subr.mxu0 0.0
    %137 = vmatpush1.msra.mxu0 0.0
    %138 = vmatprep.subr.mxu0 0.0
    %139 = vmatpush1.msra.mxu0 0.0
    %140 = vmatprep.subr.mxu0 0.0
    %141 = vmatpush1.msra.mxu0 0.0
    %142 = vmatprep.mubr.f32.mxu0 0.0
    %143 = vmatmul.mubr.f32.gmra.mrb[0].mxu0 %v72
    %v144 = vpop.f32.mrb[0].mxu0
    %v145 = vadd.f32 0.0, %v144
    %v146 = vpop.f32.mrb[0].mxu0
    %147 = vdwg.mxu0
    %vm148 = vcmask 64512
    %v150 = vsel %vm148, %v66, 0
    %152 = vmatprep.subr.mxu0 0.0
    %153 = vmatpush1.msra.mxu0 %v67
    %154 = vmatprep.subr.mxu0 0.0
    %155 = vmatpush1.msra.mxu0 0.0
    %156 = vmatprep.subr.mxu0 0.0
    %157 = vmatpush1.msra.mxu0 0.0
    %158 = vmatprep.subr.mxu0 0.0
    %159 = vmatpush1.msra.mxu0 0.0
    %160 = vmatprep.subr.mxu0 0.0
    %161 = vmatpush1.msra.mxu0 0.0
    %162 = vmatprep.subr.mxu0 0.0
    %163 = vmatpush1.msra.mxu0 0.0
    %164 = vmatprep.subr.mxu0 0.0
    %165 = vmatpush1.msra.mxu0 0.0
    %166 = vmatprep.subr.mxu0 0.0
    %167 = vmatpush1.msra.mxu0 0.0
    %168 = vmatprep.subr.mxu0 0.0
    %169 = vmatpush1.msra.mxu0 0.0
    %170 = vmatprep.subr.mxu0 0.0
    %171 = vmatpush1.msra.mxu0 0.0
    %172 = vmatprep.subr.mxu0 0.0
    %173 = vmatpush1.msra.mxu0 0.0
    %174 = vmatprep.subr.mxu0 0.0
    %175 = vmatpush1.msra.mxu0 0.0
    %176 = vmatprep.subr.mxu0 0.0
    %177 = vmatpush1.msra.mxu0 0.0
    %178 = vmatprep.subr.mxu0 0.0
    %179 = vmatpush1.msra.mxu0 0.0
    %180 = vmatprep.subr.mxu0 0.0
    %181 = vmatpush1.msra.mxu0 0.0
    %182 = vmatprep.subr.mxu0 0.0
    %183 = vmatpush1.msra.mxu0 0.0
    %184 = vmatprep.subr.mxu0 0.0
    %185 = vmatpush1.msra.mxu0 0.0
    %186 = vmatprep.subr.mxu0 0.0
    %187 = vmatpush1.msra.mxu0 0.0
    %188 = vmatprep.subr.mxu0 0.0
    %189 = vmatpush1.msra.mxu0 0.0
    %190 = vmatprep.subr.mxu0 0.0
    %191 = vmatpush1.msra.mxu0 0.0
    %192 = vmatprep.subr.mxu0 0.0
    %193 = vmatpush1.msra.mxu0 0.0
    %194 = vmatprep.subr.mxu0 0.0
    %195 = vmatpush1.msra.mxu0 0.0
    %196 = vmatprep.subr.mxu0 0.0
    %197 = vmatpush1.msra.mxu0 0.0
    %198 = vmatprep.subr.mxu0 0.0
    %199 = vmatpush1.msra.mxu0 0.0
    %200 = vmatprep.subr.mxu0 0.0
    %201 = vmatpush1.msra.mxu0 0.0
    %202 = vmatprep.subr.mxu0 0.0
    %203 = vmatpush1.msra.mxu0 0.0
    %204 = vmatprep.subr.mxu0 0.0
    %205 = vmatpush1.msra.mxu0 0.0
    %206 = vmatprep.subr.mxu0 0.0
    %207 = vmatpush1.msra.mxu0 0.0
    %208 = vmatprep.subr.mxu0 0.0
    %209 = vmatpush1.msra.mxu0 0.0
    %210 = vmatprep.subr.mxu0 0.0
    %211 = vmatpush1.msra.mxu0 0.0
    %212 = vmatprep.subr.mxu0 0.0
    %213 = vmatpush1.msra.mxu0 0.0
    %214 = vmatprep.subr.mxu0 0.0
    %215 = vmatpush1.msra.mxu0 0.0
    %216 = vmatprep.mubr.f32.mxu0 0.0
    %217 = vmatmul.mubr.f32.gmra.mrb[0].mxu0 %v150
    %v218 = vpop.f32.mrb[0].mxu0
    %v219 = vadd.f32 %v145, %v218
    %v220 = vpop.f32.mrb[0].mxu0
    %221 = vdwg.mxu0
    %v223 = vlaneseq
    %v224 = vshrl.u32 %v223, 7
    %v225 = vsub.s32 0, %v224
    %v226 = vrot.slane %v65, %v225
    %v228 = vadd.f32 %v219, %v226
    %v229 = vmax.f32 %v228, 0.0
    %v230 = vld [vmem:[%s4] sm:$0xff]
    %v231 = vld [vmem:[%s4 + $0x8] sm:$0xff]
    %v232 = vld [vmem:[%s4 + $0x10] sm:$0xff]
    %v233 = vld [vmem:[%s4 + $0x18] sm:$0xff]
    %234 = vrot.lane.b32.xlu0 %v226, 96
    %v235 = vpop.permute.xlu0 %234
    %vm237 = vcmask 261120
    %v239 = vsel %vm237, %v229, 0
    %241 = vmatprep.subr.mxu0 0.0
    %242 = vmatpush1.msra.mxu0 %v230
    %243 = vmatprep.subr.mxu0 0.0
    %244 = vmatpush1.msra.mxu0 %v231
    %245 = vmatprep.subr.mxu0 0.0
    %246 = vmatpush1.msra.mxu0 %v232
    %247 = vmatprep.subr.mxu0 0.0
    %248 = vmatpush1.msra.mxu0 %v233
    %249 = vmatprep.subr.mxu0 0.0
    %250 = vmatpush1.msra.mxu0 0.0
    %251 = vmatprep.subr.mxu0 0.0
    %252 = vmatpush1.msra.mxu0 0.0
    %253 = vmatprep.subr.mxu0 0.0
    %254 = vmatpush1.msra.mxu0 0.0
    %255 = vmatprep.subr.mxu0 0.0
    %256 = vmatpush1.msra.mxu0 0.0
    %257 = vmatprep.subr.mxu0 0.0
    %258 = vmatpush1.msra.mxu0 0.0
    %259 = vmatprep.subr.mxu0 0.0
    %260 = vmatpush1.msra.mxu0 0.0
    %261 = vmatprep.subr.mxu0 0.0
    %262 = vmatpush1.msra.mxu0 0.0
    %263 = vmatprep.subr.mxu0 0.0
    %264 = vmatpush1.msra.mxu0 0.0
    %265 = vmatprep.subr.mxu0 0.0
    %266 = vmatpush1.msra.mxu0 0.0
    %267 = vmatprep.subr.mxu0 0.0
    %268 = vmatpush1.msra.mxu0 0.0
    %269 = vmatprep.subr.mxu0 0.0
    %270 = vmatpush1.msra.mxu0 0.0
    %271 = vmatprep.subr.mxu0 0.0
    %272 = vmatpush1.msra.mxu0 0.0
    %273 = vmatprep.subr.mxu0 0.0
    %274 = vmatpush1.msra.mxu0 0.0
    %275 = vmatprep.subr.mxu0 0.0
    %276 = vmatpush1.msra.mxu0 0.0
    %277 = vmatprep.subr.mxu0 0.0
    %278 = vmatpush1.msra.mxu0 0.0
    %279 = vmatprep.subr.mxu0 0.0
    %280 = vmatpush1.msra.mxu0 0.0
    %281 = vmatprep.subr.mxu0 0.0
    %282 = vmatpush1.msra.mxu0 0.0
    %283 = vmatprep.subr.mxu0 0.0
    %284 = vmatpush1.msra.mxu0 0.0
    %285 = vmatprep.subr.mxu0 0.0
    %286 = vmatpush1.msra.mxu0 0.0
    %287 = vmatprep.subr.mxu0 0.0
    %288 = vmatpush1.msra.mxu0 0.0
    %289 = vmatprep.subr.mxu0 0.0
    %290 = vmatpush1.msra.mxu0 0.0
    %291 = vmatprep.subr.mxu0 0.0
    %292 = vmatpush1.msra.mxu0 0.0
    %293 = vmatprep.subr.mxu0 0.0
    %294 = vmatpush1.msra.mxu0 0.0
    %295 = vmatprep.subr.mxu0 0.0
    %296 = vmatpush1.msra.mxu0 0.0
    %297 = vmatprep.subr.mxu0 0.0
    %298 = vmatpush1.msra.mxu0 0.0
    %299 = vmatprep.subr.mxu0 0.0
    %300 = vmatpush1.msra.mxu0 0.0
    %301 = vmatprep.subr.mxu0 0.0
    %302 = vmatpush1.msra.mxu0 0.0
    %303 = vmatprep.subr.mxu0 0.0
    %304 = vmatpush1.msra.mxu0 0.0
    %305 = vmatprep.mubr.f32.mxu0 0.0
    %306 = vmatmul.mubr.f32.gmra.mrb[0].mxu0 %v239
    %v307 = vpop.f32.mrb[0].mxu0
    %v308 = vadd.f32 %v235, %v307
    %v309 = vpop.f32.mrb[0].mxu0
    %310 = vdwg.mxu0
    %v311 = vmax.f32 %v308, 0.0
    %v312 = vld [vmem:[%s5] sm:$0xff]
    %v313 = vld [vmem:[%s5 + $0x8] sm:$0xff]
    %v314 = vld [vmem:[%s5 + $0x10] sm:$0xff]
    %v315 = vld [vmem:[%s5 + $0x18] sm:$0xff]
    %316 = vrot.lane.b32.xlu0 %v226, 64
    %v317 = vpop.permute.xlu0 %316
    %v320 = vsel %vm237, %v311, 0
    %322 = vmatprep.subr.mxu0 0.0
    %323 = vmatpush1.msra.mxu0 %v312
    %324 = vmatprep.subr.mxu0 0.0
    %325 = vmatpush1.msra.mxu0 %v313
    %326 = vmatprep.subr.mxu0 0.0
    %327 = vmatpush1.msra.mxu0 %v314
    %328 = vmatprep.subr.mxu0 0.0
    %329 = vmatpush1.msra.mxu0 %v315
    %330 = vmatprep.subr.mxu0 0.0
    %331 = vmatpush1.msra.mxu0 0.0
    %332 = vmatprep.subr.mxu0 0.0
    %333 = vmatpush1.msra.mxu0 0.0
    %334 = vmatprep.subr.mxu0 0.0
    %335 = vmatpush1.msra.mxu0 0.0
    %336 = vmatprep.subr.mxu0 0.0
    %337 = vmatpush1.msra.mxu0 0.0
    %338 = vmatprep.subr.mxu0 0.0
    %339 = vmatpush1.msra.mxu0 0.0
    %340 = vmatprep.subr.mxu0 0.0
    %341 = vmatpush1.msra.mxu0 0.0
    %342 = vmatprep.subr.mxu0 0.0
    %343 = vmatpush1.msra.mxu0 0.0
    %344 = vmatprep.subr.mxu0 0.0
    %345 = vmatpush1.msra.mxu0 0.0
    %346 = vmatprep.subr.mxu0 0.0
    %347 = vmatpush1.msra.mxu0 0.0
    %348 = vmatprep.subr.mxu0 0.0
    %349 = vmatpush1.msra.mxu0 0.0
    %350 = vmatprep.subr.mxu0 0.0
    %351 = vmatpush1.msra.mxu0 0.0
    %352 = vmatprep.subr.mxu0 0.0
    %353 = vmatpush1.msra.mxu0 0.0
    %354 = vmatprep.subr.mxu0 0.0
    %355 = vmatpush1.msra.mxu0 0.0
    %356 = vmatprep.subr.mxu0 0.0
    %357 = vmatpush1.msra.mxu0 0.0
    %358 = vmatprep.subr.mxu0 0.0
    %359 = vmatpush1.msra.mxu0 0.0
    %360 = vmatprep.subr.mxu0 0.0
    %361 = vmatpush1.msra.mxu0 0.0
    %362 = vmatprep.subr.mxu0 0.0
    %363 = vmatpush1.msra.mxu0 0.0
    %364 = vmatprep.subr.mxu0 0.0
    %365 = vmatpush1.msra.mxu0 0.0
    %366 = vmatprep.subr.mxu0 0.0
    %367 = vmatpush1.msra.mxu0 0.0
    %368 = vmatprep.subr.mxu0 0.0
    %369 = vmatpush1.msra.mxu0 0.0
    %370 = vmatprep.subr.mxu0 0.0
    %371 = vmatpush1.msra.mxu0 0.0
    %372 = vmatprep.subr.mxu0 0.0
    %373 = vmatpush1.msra.mxu0 0.0
    %374 = vmatprep.subr.mxu0 0.0
    %375 = vmatpush1.msra.mxu0 0.0
    %376 = vmatprep.subr.mxu0 0.0
    %377 = vmatpush1.msra.mxu0 0.0
    %378 = vmatprep.subr.mxu0 0.0
    %379 = vmatpush1.msra.mxu0 0.0
    %380 = vmatprep.subr.mxu0 0.0
    %381 = vmatpush1.msra.mxu0 0.0
    %382 = vmatprep.subr.mxu0 0.0
    %383 = vmatpush1.msra.mxu0 0.0
    %384 = vmatprep.subr.mxu0 0.0
    %385 = vmatpush1.msra.mxu0 0.0
    %386 = vmatprep.mubr.f32.mxu0 0.0
    %387 = vmatmul.mubr.f32.gmra.mrb[0].mxu0 %v320
    %v388 = vpop.f32.mrb[0].mxu0
    %v389 = vadd.f32 %v317, %v388
    %v390 = vpop.f32.mrb[0].mxu0
    %391 = vdwg.mxu0
    %v392 = vmax.f32 %v389, 0.0
    %v393 = vld [vmem:[%s6] sm:$0xff]
    %v394 = vld [vmem:[%s6 + $0x8] sm:$0xff]
    %v395 = vld [vmem:[%s6 + $0x10] sm:$0xff]
    %v396 = vld [vmem:[%s6 + $0x18] sm:$0xff]
    %397 = vrot.lane.b32.xlu0 %v226, 32
    %v398 = vpop.permute.xlu0 %397
    %v401 = vsel %vm237, %v392, 0
    %403 = vmatprep.subr.mxu0 0.0
    %404 = vmatpush1.msra.mxu0 %v393
    %405 = vmatprep.subr.mxu0 0.0
    %406 = vmatpush1.msra.mxu0 %v394
    %407 = vmatprep.subr.mxu0 0.0
    %408 = vmatpush1.msra.mxu0 %v395
    %409 = vmatprep.subr.mxu0 0.0
    %410 = vmatpush1.msra.mxu0 %v396
    %411 = vmatprep.subr.mxu0 0.0
    %412 = vmatpush1.msra.mxu0 0.0
    %413 = vmatprep.subr.mxu0 0.0
    %414 = vmatpush1.msra.mxu0 0.0
    %415 = vmatprep.subr.mxu0 0.0
    %416 = vmatpush1.msra.mxu0 0.0
    %417 = vmatprep.subr.mxu0 0.0
    %418 = vmatpush1.msra.mxu0 0.0
    %419 = vmatprep.subr.mxu0 0.0
    %420 = vmatpush1.msra.mxu0 0.0
    %421 = vmatprep.subr.mxu0 0.0
    %422 = vmatpush1.msra.mxu0 0.0
    %423 = vmatprep.subr.mxu0 0.0
    %424 = vmatpush1.msra.mxu0 0.0
    %425 = vmatprep.subr.mxu0 0.0
    %426 = vmatpush1.msra.mxu0 0.0
    %427 = vmatprep.subr.mxu0 0.0
    %428 = vmatpush1.msra.mxu0 0.0
    %429 = vmatprep.subr.mxu0 0.0
    %430 = vmatpush1.msra.mxu0 0.0
    %431 = vmatprep.subr.mxu0 0.0
    %432 = vmatpush1.msra.mxu0 0.0
    %433 = vmatprep.subr.mxu0 0.0
    %434 = vmatpush1.msra.mxu0 0.0
    %435 = vmatprep.subr.mxu0 0.0
    %436 = vmatpush1.msra.mxu0 0.0
    %437 = vmatprep.subr.mxu0 0.0
    %438 = vmatpush1.msra.mxu0 0.0
    %439 = vmatprep.subr.mxu0 0.0
    %440 = vmatpush1.msra.mxu0 0.0
    %441 = vmatprep.subr.mxu0 0.0
    %442 = vmatpush1.msra.mxu0 0.0
    %443 = vmatprep.subr.mxu0 0.0
    %444 = vmatpush1.msra.mxu0 0.0
    %445 = vmatprep.subr.mxu0 0.0
    %446 = vmatpush1.msra.mxu0 0.0
    %447 = vmatprep.subr.mxu0 0.0
    %448 = vmatpush1.msra.mxu0 0.0
    %449 = vmatprep.subr.mxu0 0.0
    %450 = vmatpush1.msra.mxu0 0.0
    %451 = vmatprep.subr.mxu0 0.0
    %452 = vmatpush1.msra.mxu0 0.0
    %453 = vmatprep.subr.mxu0 0.0
    %454 = vmatpush1.msra.mxu0 0.0
    %455 = vmatprep.subr.mxu0 0.0
    %456 = vmatpush1.msra.mxu0 0.0
    %457 = vmatprep.subr.mxu0 0.0
    %458 = vmatpush1.msra.mxu0 0.0
    %459 = vmatprep.subr.mxu0 0.0
    %460 = vmatpush1.msra.mxu0 0.0
    %461 = vmatprep.subr.mxu0 0.0
    %462 = vmatpush1.msra.mxu0 0.0
    %463 = vmatprep.subr.mxu0 0.0
    %464 = vmatpush1.msra.mxu0 0.0
    %465 = vmatprep.subr.mxu0 0.0
    %466 = vmatpush1.msra.mxu0 0.0
    %467 = vmatprep.mubr.f32.mxu0 0.0
    %468 = vmatmul.mubr.f32.gmra.mrb[0].mxu0 %v401
    %v469 = vpop.f32.mrb[0].mxu0
    %v470 = vadd.f32 %v398, %v469
    %v471 = vpop.f32.mrb[0].mxu0
    %472 = vdwg.mxu0
    %vm473 = vcmask 156672
    %474 = vst.msk [vmem:[#allocation8] sm:$0x3] %vm473, %v470
    // Predicated region
    $region46: #{tpu_custom_call.1} parent=1 // pred_check
      _
    $region47: #{tpu_custom_call.1} parent=1 // pred_check_branch
      %476 = sbr.rel (0) target = $region49
    $region48: #{tpu_custom_call.1} parent=1 // pred_region
      %s478 = ssub.s32 32, 32
      %479 = vsyncadd [#allocation4], %s478
      %s481 = sshll.u32 [#allocation8], 4
      %s482 = int_to_ptr.vmem [resolvable:$true] %s481
      %484 = dma.vmem_to_hbm [thread:$0]  %s482, 32, %s8, [#allocation4]
    $region49: #{tpu_custom_call.1} parent=1 // pred_fallthru
      _
    // Predicated region
    $region50: #{tpu_custom_call.1} parent=1 // pred_check
      _
    $region51: #{tpu_custom_call.1} parent=1 // pred_check_branch
      %486 = sbr.rel (0) target = $region53
    $region52: #{tpu_custom_call.1} parent=1 // pred_region
      %487 = dma.done [#allocation4], 32
    $region53: #{tpu_custom_call.1} parent=1 // pred_fallthru
      _
    %488 = vsyncpa [#allocation3], 1
    %489 = vsyncpa [#allocation6], 1
    %490 = vsyncpa [#allocation4], 1

</llo_original>
